<compile_context>
chip_gen: v6e
topology: v6e:2x2x1
jax: 0.10.0
libtpu: 0.0.40
codegen_flags: <defaults>
</compile_context>

<pallas_src>
import numpy as np
import jax
import jax.numpy as jnp
from jax.experimental import pallas as pl
from jax.experimental.pallas import tpu as pltpu


def _round_up(x, m):
    return (x + m - 1) // m * m


def _embed_nd_kernel(ids_ref, w_ref, phase_ref, out_ref):
    """out[n, l] = sin( sum_i ids[n, i] * w[i, l] + phase[l] )."""
    ids = ids_ref[...].astype(jnp.float32)                   # (tile_n, n_axes)
    n_axes = w_ref.shape[0]
    # Exact-f32 rank-1 accumulation on the VPU (n_axes is tiny and static).
    angles = phase_ref[...] + ids[:, 0:1] * w_ref[0:1, :]    # (tile_n, lanes)
    for i in range(1, n_axes):
        angles = angles + ids[:, i:i + 1] * w_ref[i:i + 1, :]
    out_ref[...] = jnp.sin(angles).astype(out_ref.dtype)


def _build_tables(axes_dim, theta):
    """Per-lane (sign-folded) omega and phase tables, built in float64."""
    d_half = sum(axes_dim) // 2
    lanes = 4 * d_half                                  # flattened (d, i, j) = 2*dim
    w = np.zeros((len(axes_dim), lanes), dtype=np.float64)
    phase = np.zeros((1, lanes), dtype=np.float64)
    off = 0
    for i, ad in enumerate(axes_dim):
        assert ad % 2 == 0, "axes_dim entries must be even"
        omega = 1.0 / theta ** (np.arange(0, ad, 2, dtype=np.float64) / ad)
        lo, hi = 4 * off, 4 * (off + ad // 2)
        # flat r = 2*i + j:  r=0 -> cos, r=1 -> -sin, r=2 -> sin, r=3 -> cos
        #   cos(x) = sin(x + pi/2);   -sin(x) = sin(-x)
        for r, sgn, ph in ((0, 1.0, np.pi / 2), (1, -1.0, 0.0),
                           (2, 1.0, 0.0), (3, 1.0, np.pi / 2)):
            w[i, lo + r:hi:4] = sgn * omega
            phase[0, lo + r:hi:4] = ph
        off += ad // 2
    return (jnp.asarray(w, jnp.float32), jnp.asarray(phase, jnp.float32),
            d_half, lanes)


def _choose_tile(R, lanes):
    """Rows per grid step: ~4 MiB of f32 output, but keep >= ~4 grid steps."""
    t = (4 << 20) // (lanes * 4)        # ~4 MiB output block
    t = min(t, -(-R // 4))              # >= ~4 steps (>= 2 per v7x TensorCore)
    t = max(t, 8)
    t = _round_up(t, 128)
    if t >= R:
        return R                        # single full block (full-dim exemption)
    return t


def embed_nd(ids, *, dim=None, theta=10000, axes_dim=(16, 56, 56)):
    """Pallas implementation of EmbedND.forward.

    ids: (B, N, n_axes) integer or float positions.
    Returns: (B, 1, N, sum(axes_dim)//2, 2, 2) float32.
    (`dim` is kept only for API parity; sum(axes_dim) defines the embedding.)
    """
    axes_dim = tuple(axes_dim)
    B, N, n_axes = ids.shape
    assert n_axes == len(axes_dim)
    w, phase, d_half, lanes = _build_tables(axes_dim, theta)

    R = B * N
    ids2 = ids.reshape(R, n_axes).astype(jnp.float32)

    tile_n = _choose_tile(R, lanes)
    # No padding of the output and no post-kernel slice: partial last block's
    # out-of-range rows are masked on the store by Pallas.
    grid = (pl.cdiv(R, tile_n),)

    out2 = pl.pallas_call(
        _embed_nd_kernel,
        out_shape=jax.ShapeDtypeStruct((R, lanes), jnp.float32),
        grid_spec=pltpu.PrefetchScalarGridSpec(
            num_scalar_prefetch=0,
            grid=grid,
            in_specs=[
                pl.BlockSpec((tile_n, n_axes), lambda i: (i, 0)),  # ids rows
                pl.BlockSpec((n_axes, lanes), lambda i: (0, 0)),   # W table (resident)
                pl.BlockSpec((1, lanes), lambda i: (0, 0)),        # phase (resident)
            ],
            out_specs=pl.BlockSpec((tile_n, lanes), lambda i: (i, 0)),
        ),
        compiler_params=pltpu.CompilerParams(
            dimension_semantics=("parallel",),
            vmem_limit_bytes=32 * 1024 * 1024,
        ),
    )(ids2, w, phase)

    # (R, 4*d_half) -> (B, 1, N, d_half, 2, 2): contiguous reshape, no copy.
    return out2.reshape(B, N, d_half, 2, 2)[:, None]


if __name__ == "__main__":
    key = jax.random.PRNGKey(0)
    theta = 10000
    axes_dim = (16, 56, 56)   # FLUX-style; sum = 128 = per-head dim

    # Pure-JAX reference (same math as the PyTorch module, f32 angles).
    def rope_ref(pos, ad, th):
        omega = jnp.asarray(
            1.0 / th ** (np.arange(0, ad, 2, dtype=np.float64) / ad), jnp.float32)
        ang = pos[..., None].astype(jnp.float32) * omega        # (B, N, ad//2)
        c, s = jnp.cos(ang), jnp.sin(ang)
        m = jnp.stack([c, -s, s, c], axis=-1)
        return m.reshape(*ang.shape, 2, 2)

    def reference(ids):
        return jnp.concatenate(
            [rope_ref(ids[..., i], axes_dim[i], theta)
             for i in range(len(axes_dim))], axis=-3)[:, None]

    # Case 1: small shape.  Case 2: row count not a multiple of the tile size,
    # exercising the masked partial last output block.
    for case, (B, N) in enumerate(((2, 8), (1, 200))):
        ids = jax.random.randint(jax.random.fold_in(key, case),
                                 (B, N, len(axes_dim)), 0, 32).astype(jnp.float32)
        out = jax.block_until_ready(
            embed_nd(ids, dim=sum(axes_dim), theta=theta, axes_dim=axes_dim))
        assert out.shape == (B, 1, N, sum(axes_dim) // 2, 2, 2), out.shape
        ref = reference(ids)
        max_err = float(jnp.max(jnp.abs(out - ref)))
        assert jnp.allclose(out, ref, atol=1e-4, rtol=1e-4), (B, N, max_err)

    print("KERNEL_OK")
</pallas_src>

<mosaic_0001>
module attributes {stable_mosaic.version = 11 : i64} {
  func.func @_embed_nd_kernel(%arg0: i32, %arg1: memref<16x3xf32, #tpu.memory_space<vmem>>, %arg2: memref<3x256xf32, #tpu.memory_space<vmem>>, %arg3: memref<1x256xf32, #tpu.memory_space<vmem>>, %arg4: memref<16x256xf32, #tpu.memory_space<vmem>>) attributes {dimension_semantics = [#tpu.dimension_semantics<parallel>], iteration_bounds = array<i64: 1>, scalar_prefetch = 0 : i64, scratch_operands = 0 : i64, tpu.core_type = #tpu.core_type<tc>, window_params = [{transform_indices = @transform_0, window_bounds = array<i64: 16, 3>}, {pipeline_mode = #tpu.pipeline_mode<synchronous>, transform_indices = @transform_1, window_bounds = array<i64: 3, 256>}, {pipeline_mode = #tpu.pipeline_mode<synchronous>, transform_indices = @transform_2, window_bounds = array<i64: 1, 256>}, {transform_indices = @transform_3, window_bounds = array<i64: 16, 256>}]} {
    %c0 = arith.constant 0 : index
    %c0_0 = arith.constant 0 : index
    %0 = vector.load %arg1[%c0, %c0_0] : memref<16x3xf32, #tpu.memory_space<vmem>>, vector<16x3xf32>
    %c0_1 = arith.constant 0 : index
    %c0_2 = arith.constant 0 : index
    %1 = vector.load %arg3[%c0_1, %c0_2] : memref<1x256xf32, #tpu.memory_space<vmem>>, vector<1x256xf32>
    %2 = vector.extract_strided_slice %0 {offsets = [0, 0], sizes = [16, 1], strides = [1, 1]} : vector<16x3xf32> to vector<16x1xf32>
    %c0_3 = arith.constant 0 : index
    %c0_4 = arith.constant 0 : index
    %3 = vector.load %arg2[%c0_3, %c0_4] : memref<3x256xf32, #tpu.memory_space<vmem>>, vector<1x256xf32>
    %4 = vector.broadcast %2 : vector<16x1xf32> to vector<16x256xf32>
    %5 = vector.broadcast %3 : vector<1x256xf32> to vector<16x256xf32>
    %6 = arith.mulf %4, %5 : vector<16x256xf32>
    %7 = vector.broadcast %1 : vector<1x256xf32> to vector<16x256xf32>
    %8 = arith.addf %7, %6 : vector<16x256xf32>
    %9 = vector.extract_strided_slice %0 {offsets = [0, 1], sizes = [16, 1], strides = [1, 1]} : vector<16x3xf32> to vector<16x1xf32>
    %c1 = arith.constant 1 : index
    %c0_5 = arith.constant 0 : index
    %10 = vector.load %arg2[%c1, %c0_5] : memref<3x256xf32, #tpu.memory_space<vmem>>, vector<1x256xf32>
    %11 = vector.broadcast %9 : vector<16x1xf32> to vector<16x256xf32>
    %12 = vector.broadcast %10 : vector<1x256xf32> to vector<16x256xf32>
    %13 = arith.mulf %11, %12 : vector<16x256xf32>
    %14 = arith.addf %8, %13 : vector<16x256xf32>
    %15 = vector.extract_strided_slice %0 {offsets = [0, 2], sizes = [16, 1], strides = [1, 1]} : vector<16x3xf32> to vector<16x1xf32>
    %c2 = arith.constant 2 : index
    %c0_6 = arith.constant 0 : index
    %16 = vector.load %arg2[%c2, %c0_6] : memref<3x256xf32, #tpu.memory_space<vmem>>, vector<1x256xf32>
    %17 = vector.broadcast %15 : vector<16x1xf32> to vector<16x256xf32>
    %18 = vector.broadcast %16 : vector<1x256xf32> to vector<16x256xf32>
    %19 = arith.mulf %17, %18 : vector<16x256xf32>
    %20 = arith.addf %14, %19 : vector<16x256xf32>
    %21 = math.sin %20 : vector<16x256xf32>
    %c0_7 = arith.constant 0 : index
    %c0_8 = arith.constant 0 : index
    %22 = vector.load %arg4[%c0_7, %c0_8] : memref<16x256xf32, #tpu.memory_space<vmem>>, vector<16x256xf32>
    tpu.vector_store %arg4[%c0_7, %c0_8], %21 {strides = array<i32>} : memref<16x256xf32, #tpu.memory_space<vmem>>, vector<16x256xf32>,
    return
  }
  func.func @transform_0(%arg0: i32) -> (i32, i32) {
    %c0_i32 = arith.constant 0 : i32
    %c0_i32_0 = arith.constant 0 : i32
    return %arg0, %c0_i32 : i32, i32
  }
  func.func @transform_1(%arg0: i32) -> (i32, i32) {
    %c0_i32 = arith.constant 0 : i32
    %c0_i32_0 = arith.constant 0 : i32
    %c0_i32_1 = arith.constant 0 : i32
    return %c0_i32, %c0_i32_0 : i32, i32
  }
  func.func @transform_2(%arg0: i32) -> (i32, i32) {
    %c0_i32 = arith.constant 0 : i32
    %c0_i32_0 = arith.constant 0 : i32
    %c0_i32_1 = arith.constant 0 : i32
    return %c0_i32, %c0_i32_0 : i32, i32
  }
  func.func @transform_3(%arg0: i32) -> (i32, i32) {
    %c0_i32 = arith.constant 0 : i32
    %c0_i32_0 = arith.constant 0 : i32
    return %arg0, %c0_i32 : i32, i32
  }
}

</mosaic_0001>

<llo_original>
// kernel: tpu_custom_call.1
$region0: #{tpu_custom_call.1}
  #allocation0 [shape = 'u32[]', space=smem, size = 0x4, offset = 0x4, fixed_abs, tag = 'smem constant byte address 0x4 - core index']
  #allocation1 [shape = 'u32[144,128]{1,0:T(1,128)}', space=vmem, size = 0x12000, scoped, tag = 'internal scratch']
  %s0 = inlined_call_operand.vmem [shape: f32[16,3], index: 0, kind: input, shape index: {}]
  %s1 = inlined_call_operand.vmem [shape: f32[3,256], index: 1, kind: input, shape index: {}]
  %s2 = inlined_call_operand.vmem [shape: f32[1,256], index: 2, kind: input, shape index: {}]
  %s3 = inlined_call_operand.hbm [shape: f32[16,256], index: 3, kind: output, shape index: {}]
  %s4 = sld [smem:[#allocation0]]
  $region22: #{tpu_custom_call.1} parent=0
    _
  %s6 = ssub.s32 1, %s4
  %s7 = scalar_select 0, %s6, %s4
  $region1: #{tpu_custom_call.1} parent=0
    #allocation2 [shape = 'u8[16384]{0}', space=vmem, size = 0x4000, scoped, tag = 'output window, operand 0, single buffered']
    #allocation3 [shape = 's32[1]{0}', space=sflag, size = 0x4, scoped, tag = 'scoped memory for tpu_custom_call.1']
    %8 = vsyncpa [#allocation3], 0
    // Predicated region
    $region2: #{tpu_custom_call.1} parent=1 // pred_check
      _
    $region3: #{tpu_custom_call.1} parent=1 // pred_check_branch
      %10 = sbr.rel (0) target = $region5
    $region4: #{tpu_custom_call.1} parent=1 // pred_region
      _
    $region5: #{tpu_custom_call.1} parent=1 // pred_fallthru
      _
    // Predicated region
    $region6: #{tpu_custom_call.1} parent=1 // pred_check
      _
    $region7: #{tpu_custom_call.1} parent=1 // pred_check_branch
      %12 = sbr.rel (0) target = $region9
    $region8: #{tpu_custom_call.1} parent=1 // pred_region
      _
    $region9: #{tpu_custom_call.1} parent=1 // pred_fallthru
      _
    // Predicated region
    $region10: #{tpu_custom_call.1} parent=1 // pred_check
      _
    $region11: #{tpu_custom_call.1} parent=1 // pred_check_branch
      %14 = sbr.rel (0) target = $region13
    $region12: #{tpu_custom_call.1} parent=1 // pred_region
      _
    $region13: #{tpu_custom_call.1} parent=1 // pred_fallthru
      _
    %v15 = vld [vmem:[%s0] sm:$0xff]
    %v16 = vld [vmem:[%s0 + $0x8] sm:$0xff]
    %v17 = vld [vmem:[%s2] sm:$0x3]
    %v18 = vld [vmem:[%s1] ss:$4 sm:$0x3]
    %20 = vset.pattern.permute.xlu0 0
    %21 = vperm.xlu0 %20, %v15
    %v22 = vpop.permute.xlu0 %21
    %25 = vset.pattern.permute.xlu0 0
    %26 = vperm.xlu0 %25, %v16
    %v27 = vpop.permute.xlu0 %26
    %v30 = vlaneseq
    %v31 = vshrl.u32 %v30, 7
    %v32 = vsub.s32 0, %v31
    %v33 = vrot.slane %v18, %v32
    %v34 = vlaneseq
    %v35 = vshrl.u32 %v34, 7
    %v36 = vsub.s32 1, %v35
    %v37 = vrot.slane %v18, %v36
    %v40 = vmul.f32 %v22, %v33
    %v41 = vmul.f32 %v22, %v37
    %v42 = vmul.f32 %v27, %v33
    %v43 = vmul.f32 %v27, %v37
    %v45 = vlaneseq
    %v46 = vshrl.u32 %v45, 7
    %v47 = vsub.s32 0, %v46
    %v48 = vrot.slane %v17, %v47
    %v49 = vlaneseq
    %v50 = vshrl.u32 %v49, 7
    %v51 = vsub.s32 1, %v50
    %v52 = vrot.slane %v17, %v51
    %v55 = vadd.f32 %v48, %v40
    %v56 = vadd.f32 %v52, %v41
    %v57 = vadd.f32 %v48, %v42
    %v58 = vadd.f32 %v52, %v43
    %s59 = scalar_lea.vmem %s1, 1
    %v60 = vld [vmem:[%s59] ss:$4 sm:$0x3]
    %61 = vset.pattern.permute.xlu0 1
    %62 = vperm.xlu0 %61, %v15
    %v63 = vpop.permute.xlu0 %62
    %65 = vset.pattern.permute.xlu0 1
    %66 = vperm.xlu0 %65, %v16
    %v67 = vpop.permute.xlu0 %66
    %v70 = vlaneseq
    %v71 = vshrl.u32 %v70, 7
    %v72 = vsub.s32 0, %v71
    %v73 = vrot.slane %v60, %v72
    %v74 = vlaneseq
    %v75 = vshrl.u32 %v74, 7
    %v76 = vsub.s32 1, %v75
    %v77 = vrot.slane %v60, %v76
    %v80 = vmul.f32 %v63, %v73
    %v81 = vmul.f32 %v63, %v77
    %v82 = vmul.f32 %v67, %v73
    %v83 = vmul.f32 %v67, %v77
    %v84 = vadd.f32 %v55, %v80
    %v85 = vadd.f32 %v56, %v81
    %v86 = vadd.f32 %v57, %v82
    %v87 = vadd.f32 %v58, %v83
    %s88 = scalar_lea.vmem %s1, 2
    %v89 = vld [vmem:[%s88] ss:$4 sm:$0x3]
    %90 = vset.pattern.permute.xlu0 2
    %91 = vperm.xlu0 %90, %v15
    %v92 = vpop.permute.xlu0 %91
    %94 = vset.pattern.permute.xlu0 2
    %95 = vperm.xlu0 %94, %v16
    %v96 = vpop.permute.xlu0 %95
    %v99 = vlaneseq
    %v100 = vshrl.u32 %v99, 7
    %v101 = vsub.s32 0, %v100
    %v102 = vrot.slane %v89, %v101
    %v103 = vlaneseq
    %v104 = vshrl.u32 %v103, 7
    %v105 = vsub.s32 1, %v104
    %v106 = vrot.slane %v89, %v105
    %v109 = vmul.f32 %v92, %v102
    %v110 = vmul.f32 %v92, %v106
    %v111 = vmul.f32 %v96, %v102
    %v112 = vmul.f32 %v96, %v106
    %v113 = vadd.f32 %v84, %v109
    %v114 = vadd.f32 %v85, %v110
    %v115 = vadd.f32 %v86, %v111
    %v116 = vadd.f32 %v87, %v112
    %v117 = vand.u32 2147483647, %v113
    %vm118 = vcmp.le.f32.partialorder %v117, 0.7853982
    %vm119 = vcmp.lt.s32.totalorder %v113, 0
    %v120 = vand.u32 %v113, 2139095040
    %v121 = vshrl.u32 %v120, 23
    %v122 = vsub.s32 %v121, 127
    %v123 = vand.u32 2147483647, %v113
    %v124 = vand.u32 %v123, 8388607
    %v125 = vor.u32 %v124, 8388608
    %v126 = vsub.s32 0, %v125
    %v127 = vadd.s32 %v122, 1
    %vm128 = vcmp.gt.s32.totalorder %v127, 0
    %v129 = vsel %vm128, %v127, 0
    %v130 = vshrl.u32 %v129, 5
    %v131 = vand.u32 %v129, 31
    %v132 = vsub.s32 32, %v131
    %v133 = vshrl.u32 683565275, %v132
    %v134 = vshll.u32 683565275, %v131
    %v135 = vshrl.u32 2475754826, %v132
    %v136 = vor.u32 %v134, %v135
    %v137 = vshll.u32 2475754826, %v131
    %v138 = vshrl.u32 2131351028, %v132
    %v139 = vor.u32 %v137, %v138
    %v140 = vshll.u32 2131351028, %v131
    %v141 = vshrl.u32 2102212464, %v132
    %v142 = vor.u32 %v140, %v141
    %v143 = vshll.u32 2102212464, %v131
    %v144 = vshrl.u32 920167782, %v132
    %v145 = vor.u32 %v143, %v144
    %v146 = vshll.u32 920167782, %v131
    %v147 = vshrl.u32 1326507024, %v132
    %v148 = vor.u32 %v146, %v147
    %vm149 = vcmp.lt.s32.totalorder %v130, 1
    %vm150 = vcmp.lt.s32.totalorder %v130, 2
    %vm151 = vcmp.lt.s32.totalorder %v130, 3
    %vm152 = vcmp.lt.s32.totalorder %v130, 4
    %v153 = vsel %vm149, %v133, %v136
    %v154 = vsel %vm152, %v142, 2102212464
    %v155 = vsel %vm151, %v139, %v154
    %v156 = vsel %vm150, %v153, %v155
    %v157 = vsel %vm149, %v136, %v139
    %v158 = vsel %vm152, %v145, 920167782
    %v159 = vsel %vm151, %v142, %v158
    %v160 = vsel %vm150, %v157, %v159
    %v161 = vsel %vm149, %v139, %v142
    %v162 = vsel %vm152, %v148, 1326507024
    %v163 = vsel %vm151, %v145, %v162
    %v164 = vsel %vm150, %v161, %v163
    %v165 = vshll.u32 %v125, 8
    %v166 = vmul.u32.u64.compose %v165, %v164
    %v167 = vextract.low.u32 %v166
    %v168 = vextract.high.u32 %v166
    %v169 = vmul.u32.u64.compose %v165, %v160
    %v170 = vextract.low.u32 %v169
    %v171 = vextract.high.u32 %v169
    %v172 = vmul.u32 %v165, %v156
    %v173 = vadd.s32 %v168, %v170
    %vm174 = vc.u32 %v168, %v170
    %v175 = vadd.s32 %v171, 1
    %v176 = vsel %vm174, %v175, %v171
    %v177 = vadd.s32 %v172, %v176
    %v178 = vadd.s32 %v177, 536870912
    %v179 = vshrl.u32 %v178, 30
    %v180 = vshll.u32 %v179, 30
    %v181 = vsub.s32 %v177, %v180
    %vm182 = vcmp.lt.s32.totalorder %v181, 0
    %v183 = vsub.s32 0, %v181
    %v184 = vsel %vm182, %v183, %v181
    %v185 = vclz %v184
    %v186 = vsub.s32 %v185, 2
    %vm187 = vcmp.gt.s32.totalorder 0, %v186
    %v188 = vsel %vm187, 0, %v186
    %v189 = vsub.s32 32, %v188
    %v190 = vshll.u32 %v181, %v188
    %v191 = vshrl.u32 %v173, %v189
    %v192 = vor.u32 %v190, %v191
    %v193 = vsub.s32 4294967266, %v188
    %v194 = vadd.s32 %v193, 127
    %v195 = vshll.u32 %v194, 23
    %v196 = vor.u32 4788187, %v195
    %v197 = vand.u32 2147483647, %v196
    %v199 = vcvt.s32.f32 %v192
    %v200 = vmul.f32 %v199, %v197
    %v201 = vxor.u32 %v200, 2147483648
    %v202 = vsel %vm119, %v201, %v200
    %v203 = vsub.s32 4, %v179
    %v204 = vsel %vm119, %v203, %v179
    %v205 = vsel %vm118, %v113, %v202
    %v206 = vsel %vm118, 0, %v204
    %v207 = vcosq.f32.pop %v205
    %v208 = vsinq.f32.pop %v205
    %vm209 = vweird.f32 %v113
    %v210 = vadd.s32 %v206, 3
    %v211 = vand.u32 %v210, 3
    %vm212 = vcmp.lt.s32.totalorder %v211, 2
    %vm213 = vcmp.eq.s32.totalorder %v211, 0
    %v214 = vxor.u32 %v208, 2147483648
    %v215 = vsel %vm213, %v207, %v214
    %vm216 = vcmp.eq.s32.totalorder %v211, 2
    %v217 = vxor.u32 %v207, 2147483648
    %v218 = vsel %vm216, %v217, %v208
    %v219 = vsel %vm212, %v215, %v218
    %v220 = vsel %vm209, nan, %v219
    %v221 = vand.u32 2147483647, %v114
    %vm222 = vcmp.le.f32.partialorder %v221, 0.7853982
    %vm223 = vcmp.lt.s32.totalorder %v114, 0
    %v224 = vand.u32 %v114, 2139095040
    %v225 = vshrl.u32 %v224, 23
    %v226 = vsub.s32 %v225, 127
    %v227 = vand.u32 2147483647, %v114
    %v228 = vand.u32 %v227, 8388607
    %v229 = vor.u32 %v228, 8388608
    %v230 = vsub.s32 0, %v229
    %v231 = vadd.s32 %v226, 1
    %vm232 = vcmp.gt.s32.totalorder %v231, 0
    %v233 = vsel %vm232, %v231, 0
    %v234 = vshrl.u32 %v233, 5
    %v235 = vand.u32 %v233, 31
    %v236 = vsub.s32 32, %v235
    %v237 = vshrl.u32 683565275, %v236
    %v238 = vshll.u32 683565275, %v235
    %v239 = vshrl.u32 2475754826, %v236
    %v240 = vor.u32 %v238, %v239
    %v241 = vshll.u32 2475754826, %v235
    %v242 = vshrl.u32 2131351028, %v236
    %v243 = vor.u32 %v241, %v242
    %v244 = vshll.u32 2131351028, %v235
    %v245 = vshrl.u32 2102212464, %v236
    %v246 = vor.u32 %v244, %v245
    %v247 = vshll.u32 2102212464, %v235
    %v248 = vshrl.u32 920167782, %v236
    %v249 = vor.u32 %v247, %v248
    %v250 = vshll.u32 920167782, %v235
    %v251 = vshrl.u32 1326507024, %v236
    %v252 = vor.u32 %v250, %v251
    %vm253 = vcmp.lt.s32.totalorder %v234, 1
    %vm254 = vcmp.lt.s32.totalorder %v234, 2
    %vm255 = vcmp.lt.s32.totalorder %v234, 3
    %vm256 = vcmp.lt.s32.totalorder %v234, 4
    %v257 = vsel %vm253, %v237, %v240
    %v258 = vsel %vm256, %v246, 2102212464
    %v259 = vsel %vm255, %v243, %v258
    %v260 = vsel %vm254, %v257, %v259
    %v261 = vsel %vm253, %v240, %v243
    %v262 = vsel %vm256, %v249, 920167782
    %v263 = vsel %vm255, %v246, %v262
    %v264 = vsel %vm254, %v261, %v263
    %v265 = vsel %vm253, %v243, %v246
    %v266 = vsel %vm256, %v252, 1326507024
    %v267 = vsel %vm255, %v249, %v266
    %v268 = vsel %vm254, %v265, %v267
    %v269 = vshll.u32 %v229, 8
    %v270 = vmul.u32.u64.compose %v269, %v268
    %v271 = vextract.low.u32 %v270
    %v272 = vextract.high.u32 %v270
    %v273 = vmul.u32.u64.compose %v269, %v264
    %v274 = vextract.low.u32 %v273
    %v275 = vextract.high.u32 %v273
    %v276 = vmul.u32 %v269, %v260
    %v277 = vadd.s32 %v272, %v274
    %vm278 = vc.u32 %v272, %v274
    %v279 = vadd.s32 %v275, 1
    %v280 = vsel %vm278, %v279, %v275
    %v281 = vadd.s32 %v276, %v280
    %v282 = vadd.s32 %v281, 536870912
    %v283 = vshrl.u32 %v282, 30
    %v284 = vshll.u32 %v283, 30
    %v285 = vsub.s32 %v281, %v284
    %vm286 = vcmp.lt.s32.totalorder %v285, 0
    %v287 = vsub.s32 0, %v285
    %v288 = vsel %vm286, %v287, %v285
    %v289 = vclz %v288
    %v290 = vsub.s32 %v289, 2
    %vm291 = vcmp.gt.s32.totalorder 0, %v290
    %v292 = vsel %vm291, 0, %v290
    %v293 = vsub.s32 32, %v292
    %v294 = vshll.u32 %v285, %v292
    %v295 = vshrl.u32 %v277, %v293
    %v296 = vor.u32 %v294, %v295
    %v297 = vsub.s32 4294967266, %v292
    %v298 = vadd.s32 %v297, 127
    %v299 = vshll.u32 %v298, 23
    %v300 = vor.u32 4788187, %v299
    %v301 = vand.u32 2147483647, %v300
    %v303 = vcvt.s32.f32 %v296
    %v304 = vmul.f32 %v303, %v301
    %v305 = vxor.u32 %v304, 2147483648
    %v306 = vsel %vm223, %v305, %v304
    %v307 = vsub.s32 4, %v283
    %v308 = vsel %vm223, %v307, %v283
    %v309 = vsel %vm222, %v114, %v306
    %v310 = vsel %vm222, 0, %v308
    %v311 = vcosq.f32.pop %v309
    %v312 = vsinq.f32.pop %v309
    %vm313 = vweird.f32 %v114
    %v314 = vadd.s32 %v310, 3
    %v315 = vand.u32 %v314, 3
    %vm316 = vcmp.lt.s32.totalorder %v315, 2
    %vm317 = vcmp.eq.s32.totalorder %v315, 0
    %v318 = vxor.u32 %v312, 2147483648
    %v319 = vsel %vm317, %v311, %v318
    %vm320 = vcmp.eq.s32.totalorder %v315, 2
    %v321 = vxor.u32 %v311, 2147483648
    %v322 = vsel %vm320, %v321, %v312
    %v323 = vsel %vm316, %v319, %v322
    %v324 = vsel %vm313, nan, %v323
    %v325 = vand.u32 2147483647, %v115
    %vm326 = vcmp.le.f32.partialorder %v325, 0.7853982
    %vm327 = vcmp.lt.s32.totalorder %v115, 0
    %v328 = vand.u32 %v115, 2139095040
    %v329 = vshrl.u32 %v328, 23
    %v330 = vsub.s32 %v329, 127
    %v331 = vand.u32 2147483647, %v115
    %v332 = vand.u32 %v331, 8388607
    %v333 = vor.u32 %v332, 8388608
    %v334 = vsub.s32 0, %v333
    %v335 = vadd.s32 %v330, 1
    %vm336 = vcmp.gt.s32.totalorder %v335, 0
    %v337 = vsel %vm336, %v335, 0
    %v338 = vshrl.u32 %v337, 5
    %v339 = vand.u32 %v337, 31
    %v340 = vsub.s32 32, %v339
    %v341 = vshrl.u32 683565275, %v340
    %v342 = vshll.u32 683565275, %v339
    %v343 = vshrl.u32 2475754826, %v340
    %v344 = vor.u32 %v342, %v343
    %v345 = vshll.u32 2475754826, %v339
    %v346 = vshrl.u32 2131351028, %v340
    %v347 = vor.u32 %v345, %v346
    %v348 = vshll.u32 2131351028, %v339
    %v349 = vshrl.u32 2102212464, %v340
    %v350 = vor.u32 %v348, %v349
    %v351 = vshll.u32 2102212464, %v339
    %v352 = vshrl.u32 920167782, %v340
    %v353 = vor.u32 %v351, %v352
    %v354 = vshll.u32 920167782, %v339
    %v355 = vshrl.u32 1326507024, %v340
    %v356 = vor.u32 %v354, %v355
    %vm357 = vcmp.lt.s32.totalorder %v338, 1
    %vm358 = vcmp.lt.s32.totalorder %v338, 2
    %vm359 = vcmp.lt.s32.totalorder %v338, 3
    %vm360 = vcmp.lt.s32.totalorder %v338, 4
    %v361 = vsel %vm357, %v341, %v344
    %v362 = vsel %vm360, %v350, 2102212464
    %v363 = vsel %vm359, %v347, %v362
    %v364 = vsel %vm358, %v361, %v363
    %v365 = vsel %vm357, %v344, %v347
    %v366 = vsel %vm360, %v353, 920167782
    %v367 = vsel %vm359, %v350, %v366
    %v368 = vsel %vm358, %v365, %v367
    %v369 = vsel %vm357, %v347, %v350
    %v370 = vsel %vm360, %v356, 1326507024
    %v371 = vsel %vm359, %v353, %v370
    %v372 = vsel %vm358, %v369, %v371
    %v373 = vshll.u32 %v333, 8
    %v374 = vmul.u32.u64.compose %v373, %v372
    %v375 = vextract.low.u32 %v374
    %v376 = vextract.high.u32 %v374
    %v377 = vmul.u32.u64.compose %v373, %v368
    %v378 = vextract.low.u32 %v377
    %v379 = vextract.high.u32 %v377
    %v380 = vmul.u32 %v373, %v364
    %v381 = vadd.s32 %v376, %v378
    %vm382 = vc.u32 %v376, %v378
    %v383 = vadd.s32 %v379, 1
    %v384 = vsel %vm382, %v383, %v379
    %v385 = vadd.s32 %v380, %v384
    %v386 = vadd.s32 %v385, 536870912
    %v387 = vshrl.u32 %v386, 30
    %v388 = vshll.u32 %v387, 30
    %v389 = vsub.s32 %v385, %v388
    %vm390 = vcmp.lt.s32.totalorder %v389, 0
    %v391 = vsub.s32 0, %v389
    %v392 = vsel %vm390, %v391, %v389
    %v393 = vclz %v392
    %v394 = vsub.s32 %v393, 2
    %vm395 = vcmp.gt.s32.totalorder 0, %v394
    %v396 = vsel %vm395, 0, %v394
    %v397 = vsub.s32 32, %v396
    %v398 = vshll.u32 %v389, %v396
    %v399 = vshrl.u32 %v381, %v397
    %v400 = vor.u32 %v398, %v399
    %v401 = vsub.s32 4294967266, %v396
    %v402 = vadd.s32 %v401, 127
    %v403 = vshll.u32 %v402, 23
    %v404 = vor.u32 4788187, %v403
    %v405 = vand.u32 2147483647, %v404
    %v407 = vcvt.s32.f32 %v400
    %v408 = vmul.f32 %v407, %v405
    %v409 = vxor.u32 %v408, 2147483648
    %v410 = vsel %vm327, %v409, %v408
    %v411 = vsub.s32 4, %v387
    %v412 = vsel %vm327, %v411, %v387
    %v413 = vsel %vm326, %v115, %v410
    %v414 = vsel %vm326, 0, %v412
    %v415 = vcosq.f32.pop %v413
    %v416 = vsinq.f32.pop %v413
    %vm417 = vweird.f32 %v115
    %v418 = vadd.s32 %v414, 3
    %v419 = vand.u32 %v418, 3
    %vm420 = vcmp.lt.s32.totalorder %v419, 2
    %vm421 = vcmp.eq.s32.totalorder %v419, 0
    %v422 = vxor.u32 %v416, 2147483648
    %v423 = vsel %vm421, %v415, %v422
    %vm424 = vcmp.eq.s32.totalorder %v419, 2
    %v425 = vxor.u32 %v415, 2147483648
    %v426 = vsel %vm424, %v425, %v416
    %v427 = vsel %vm420, %v423, %v426
    %v428 = vsel %vm417, nan, %v427
    %v429 = vand.u32 2147483647, %v116
    %vm430 = vcmp.le.f32.partialorder %v429, 0.7853982
    %vm431 = vcmp.lt.s32.totalorder %v116, 0
    %v432 = vand.u32 %v116, 2139095040
    %v433 = vshrl.u32 %v432, 23
    %v434 = vsub.s32 %v433, 127
    %v435 = vand.u32 2147483647, %v116
    %v436 = vand.u32 %v435, 8388607
    %v437 = vor.u32 %v436, 8388608
    %v438 = vsub.s32 0, %v437
    %v439 = vadd.s32 %v434, 1
    %vm440 = vcmp.gt.s32.totalorder %v439, 0
    %v441 = vsel %vm440, %v439, 0
    %v442 = vshrl.u32 %v441, 5
    %v443 = vand.u32 %v441, 31
    %v444 = vsub.s32 32, %v443
    %v445 = vshrl.u32 683565275, %v444
    %v446 = vshll.u32 683565275, %v443
    %v447 = vshrl.u32 2475754826, %v444
    %v448 = vor.u32 %v446, %v447
    %v449 = vshll.u32 2475754826, %v443
    %v450 = vshrl.u32 2131351028, %v444
    %v451 = vor.u32 %v449, %v450
    %v452 = vshll.u32 2131351028, %v443
    %v453 = vshrl.u32 2102212464, %v444
    %v454 = vor.u32 %v452, %v453
    %v455 = vshll.u32 2102212464, %v443
    %v456 = vshrl.u32 920167782, %v444
    %v457 = vor.u32 %v455, %v456
    %v458 = vshll.u32 920167782, %v443
    %v459 = vshrl.u32 1326507024, %v444
    %v460 = vor.u32 %v458, %v459
    %vm461 = vcmp.lt.s32.totalorder %v442, 1
    %vm462 = vcmp.lt.s32.totalorder %v442, 2
    %vm463 = vcmp.lt.s32.totalorder %v442, 3
    %vm464 = vcmp.lt.s32.totalorder %v442, 4
    %v465 = vsel %vm461, %v445, %v448
    %v466 = vsel %vm464, %v454, 2102212464
    %v467 = vsel %vm463, %v451, %v466
    %v468 = vsel %vm462, %v465, %v467
    %v469 = vsel %vm461, %v448, %v451
    %v470 = vsel %vm464, %v457, 920167782
    %v471 = vsel %vm463, %v454, %v470
    %v472 = vsel %vm462, %v469, %v471
    %v473 = vsel %vm461, %v451, %v454
    %v474 = vsel %vm464, %v460, 1326507024
    %v475 = vsel %vm463, %v457, %v474
    %v476 = vsel %vm462, %v473, %v475
    %v477 = vshll.u32 %v437, 8
    %v478 = vmul.u32.u64.compose %v477, %v476
    %v479 = vextract.low.u32 %v478
    %v480 = vextract.high.u32 %v478
    %v481 = vmul.u32.u64.compose %v477, %v472
    %v482 = vextract.low.u32 %v481
    %v483 = vextract.high.u32 %v481
    %v484 = vmul.u32 %v477, %v468
    %v485 = vadd.s32 %v480, %v482
    %vm486 = vc.u32 %v480, %v482
    %v487 = vadd.s32 %v483, 1
    %v488 = vsel %vm486, %v487, %v483
    %v489 = vadd.s32 %v484, %v488
    %v490 = vadd.s32 %v489, 536870912
    %v491 = vshrl.u32 %v490, 30
    %v492 = vshll.u32 %v491, 30
    %v493 = vsub.s32 %v489, %v492
    %vm494 = vcmp.lt.s32.totalorder %v493, 0
    %v495 = vsub.s32 0, %v493
    %v496 = vsel %vm494, %v495, %v493
    %v497 = vclz %v496
    %v498 = vsub.s32 %v497, 2
    %vm499 = vcmp.gt.s32.totalorder 0, %v498
    %v500 = vsel %vm499, 0, %v498
    %v501 = vsub.s32 32, %v500
    %v502 = vshll.u32 %v493, %v500
    %v503 = vshrl.u32 %v485, %v501
    %v504 = vor.u32 %v502, %v503
    %v505 = vsub.s32 4294967266, %v500
    %v506 = vadd.s32 %v505, 127
    %v507 = vshll.u32 %v506, 23
    %v508 = vor.u32 4788187, %v507
    %v509 = vand.u32 2147483647, %v508
    %v511 = vcvt.s32.f32 %v504
    %v512 = vmul.f32 %v511, %v509
    %v513 = vxor.u32 %v512, 2147483648
    %v514 = vsel %vm431, %v513, %v512
    %v515 = vsub.s32 4, %v491
    %v516 = vsel %vm431, %v515, %v491
    %v517 = vsel %vm430, %v116, %v514
    %v518 = vsel %vm430, 0, %v516
    %v519 = vcosq.f32.pop %v517
    %v520 = vsinq.f32.pop %v517
    %vm521 = vweird.f32 %v116
    %v522 = vadd.s32 %v518, 3
    %v523 = vand.u32 %v522, 3
    %vm524 = vcmp.lt.s32.totalorder %v523, 2
    %vm525 = vcmp.eq.s32.totalorder %v523, 0
    %v526 = vxor.u32 %v520, 2147483648
    %v527 = vsel %vm525, %v519, %v526
    %vm528 = vcmp.eq.s32.totalorder %v523, 2
    %v529 = vxor.u32 %v519, 2147483648
    %v530 = vsel %vm528, %v529, %v520
    %v531 = vsel %vm524, %v527, %v530
    %v532 = vsel %vm521, nan, %v531
    %533 = vst [vmem:[#allocation2] sm:$0xff] %v220
    %534 = vst [vmem:[#allocation2 + $0x8] sm:$0xff] %v324
    %535 = vst [vmem:[#allocation2 + $0x10] sm:$0xff] %v428
    %536 = vst [vmem:[#allocation2 + $0x18] sm:$0xff] %v532
    // Predicated region
    $region14: #{tpu_custom_call.1} parent=1 // pred_check
      _
    $region15: #{tpu_custom_call.1} parent=1 // pred_check_branch
      %538 = sbr.rel (0) target = $region17
    $region16: #{tpu_custom_call.1} parent=1 // pred_region
      %s540 = ssub.s32 512, 512
      %541 = vsyncadd [#allocation3], %s540
      %s542 = sshll.u32 [#allocation2], 4
      %s543 = int_to_ptr.vmem [resolvable:$true] %s542
      %548 = dma.vmem_to_hbm [thread:$0]  %s543, 512, %s3, [#allocation3], 256, 256, 16
    $region17: #{tpu_custom_call.1} parent=1 // pred_fallthru
      _
    // Predicated region
    $region18: #{tpu_custom_call.1} parent=1 // pred_check
      _
    $region19: #{tpu_custom_call.1} parent=1 // pred_check_branch
      %550 = sbr.rel (0) target = $region21
    $region20: #{tpu_custom_call.1} parent=1 // pred_region
      %551 = dma.done [#allocation3], 512
    $region21: #{tpu_custom_call.1} parent=1 // pred_fallthru
      _
    %552 = vsyncpa [#allocation3], 1

</llo_original>
